<compile_context>
chip_gen: v5e
topology: v5e:2x2
jax: 0.10.0
libtpu: 0.0.40
codegen_flags: <defaults>
</compile_context>

<pallas_src>
import functools

import jax
import jax.numpy as jnp
from jax import lax
from jax.experimental import pallas as pl
from jax.experimental.pallas import tpu as pltpu


def double_conv_kernel(x_ref, m1s_ref, m2s_ref, pp_ref, o_ref, *, H, Cout):
    NH = x_ref.shape[0]                      # N*H rows
    WCout = o_ref.shape[1]                   # W*Cout lanes
    W = WCout // Cout
    P = NH * W                               # N*H*W elements per channel
    assert W & (W - 1) == 0, "lane roll-add tree needs W to be a power of two"

    # Row-within-image index for the H-boundary ('same' padding) masks.
    h = lax.broadcasted_iota(jnp.int32, (NH, 1), 0) % H
    not_top = h != 0                         # row h-1 exists inside the image
    not_bot = h != H - 1                     # row h+1 exists inside the image

    def shift_dn(v):                         # v[r] <- v[r-1], 0 at image top
        return jnp.where(not_top, pltpu.roll(v, shift=1, axis=0), 0.0)

    def shift_up(v):                         # v[r] <- v[r+1], 0 at image bottom
        return jnp.where(not_bot, pltpu.roll(v, shift=NH - 1, axis=0), 0.0)

    x = x_ref[...]                           # (NH, W*Cin) lane-dense, f32

    # ---- conv1 (3x3, pad=1): one fused MXU push, dy taps stacked along K.
    xcat = jnp.concatenate([shift_dn(x), x, shift_up(x)], axis=1)
    acc = jnp.dot(xcat.astype(jnp.bfloat16), m1s_ref[...],
                  preferred_element_type=jnp.float32)    # (NH, W*Cout) f32
    # conv1 bias omitted: exactly cancelled by training-mode BN mean subtraction.

    # ---- BatchNorm2d (training batch stats): sublane sum + lane roll-add tree.
    s1 = jnp.sum(acc, axis=0, keepdims=True)             # (1, W*Cout)
    s2 = jnp.sum(acc * acc, axis=0, keepdims=True)       # (1, W*Cout)
    s12 = jnp.concatenate([s1, s2], axis=0)              # (2, W*Cout)
    for k in range(W.bit_length() - 1):                  # log2(W) XLU rolls
        s12 = s12 + pltpu.roll(s12, shift=Cout * (1 << k), axis=1)
    inv_p = 1.0 / float(P)
    mean_l = s12[0:1, :] * inv_p                         # per-channel, lane-dense
    ex2_l = s12[1:2, :] * inv_p
    var_l = ex2_l - mean_l * mean_l
    scale_l = pp_ref[0:1, :] * lax.rsqrt(var_l + 1e-5)   # gamma * inv_std
    shift_l = pp_ref[1:2, :] - mean_l * scale_l          # beta - mean * scale

    # ---- BN scale/shift fused with ReLU (VPU, f32).
    y = jnp.maximum(acc * scale_l + shift_l, 0.0)        # (NH, W*Cout)

    # ---- conv2 (3x3, pad=1) + 1x1 identity branch: one fused MXU push.
    ycat = jnp.concatenate([shift_dn(y), y, shift_up(y), x], axis=1)
    out = jnp.dot(ycat.astype(jnp.bfloat16), m2s_ref[...],
                  preferred_element_type=jnp.float32)

    o_ref[...] = out + pp_ref[2:3, :]                    # + (b2 + bid), lane-dense


def _conv3x3_toeplitz(w, width):
    """HWIO (3,3,Ci,Co) -> 3 (width*Ci, width*Co) dx-folded block-Toeplitz mats.

    Element [w_in*Ci+ci, w_out*Co+co] = w[dy, dx, ci, co] where
    w_in = w_out + dx - 1 (zero outside [0, width) -> 'same' padding along W).
    """
    mats = []
    for dy in range(3):
        m = None
        for dx in range(3):
            shift = jnp.eye(width, k=1 - dx, dtype=jnp.float32)
            blk = jnp.kron(shift, w[dy, dx].astype(jnp.float32))
            m = blk if m is None else m + blk
        mats.append(m)
    return mats


def prepare_params(p, width):
    """One-time constant construction (hoisted out of the per-call jit)."""
    Cin, Cout = p["wid"].shape

    m1 = _conv3x3_toeplitz(p["w1"], width)                       # 3x (W*Cin,  W*Cout)
    m2 = _conv3x3_toeplitz(p["w2"], width)                       # 3x (W*Cout, W*Cout)
    wid = jnp.kron(jnp.eye(width, dtype=jnp.float32),
                   p["wid"].astype(jnp.float32))                 # (W*Cin, W*Cout)

    # Fused K-stacked MXU operands, pre-cast to bf16 once.
    m1s = jnp.concatenate(m1, axis=0).astype(jnp.bfloat16)          # (3*W*Cin, W*Cout)
    m2s = jnp.concatenate(m2 + [wid], axis=0).astype(jnp.bfloat16)  # (3*W*Cout+W*Cin, W*Cout)

    # gamma / beta / (b2 + bid) packed lane-dense (lane = w*Cout + c), f32.
    def lane(v):
        return jnp.tile(v.reshape(1, Cout).astype(jnp.float32), (1, width))

    pp = jnp.concatenate([lane(p["gamma"]), lane(p["beta"]),
                          lane(p["b2"] + p["bid"])], axis=0)     # (3, W*Cout)

    return m1s, m2s, pp


@jax.jit
def double_conv(x_nchw, m1s, m2s, pp):
    """x_nchw: (N, Cin, H, W) float32 -> (N, Cout, H, W) float32."""
    N, Cin, H, W = x_nchw.shape
    Cout = pp.shape[1] // W

    # NCHW -> lane-dense (N*H, W*Cin): lane index = w*Cin + ci.
    x2d = jnp.transpose(x_nchw, (0, 2, 3, 1)).astype(jnp.float32)
    x2d = x2d.reshape(N * H, W * Cin)

    vmem = pl.BlockSpec(memory_space=pltpu.MemorySpace.VMEM)
    out2d = pl.pallas_call(
        functools.partial(double_conv_kernel, H=H, Cout=Cout),
        out_shape=jax.ShapeDtypeStruct((N * H, W * Cout), jnp.float32),
        in_specs=[vmem] * 4,
        out_specs=vmem,
    )(x2d, m1s, m2s, pp)

    # Lane-dense slab back to NCHW (cheap XLA layout plumbing).
    return jnp.transpose(out2d.reshape(N, H, W, Cout), (0, 3, 1, 2))


def reference(x_nchw, p):
    """Pure-JAX f32 reference mirroring the PyTorch forward (training-mode BN)."""
    x = jnp.transpose(x_nchw, (0, 2, 3, 1)).astype(jnp.float32)
    dn = ("NHWC", "HWIO", "NHWC")
    Cin, Cout = p["wid"].shape

    c1 = lax.conv_general_dilated(x, p["w1"], (1, 1), "SAME",
                                  dimension_numbers=dn)
    c1 = c1 + p["b1"].reshape(1, 1, 1, -1)
    mean = jnp.mean(c1, axis=(0, 1, 2))
    var = jnp.var(c1, axis=(0, 1, 2))
    y = (c1 - mean) * lax.rsqrt(var + 1e-5)
    y = y * p["gamma"].reshape(1, 1, 1, -1) + p["beta"].reshape(1, 1, 1, -1)
    y = jnp.maximum(y, 0.0)

    c2 = lax.conv_general_dilated(y, p["w2"], (1, 1), "SAME",
                                  dimension_numbers=dn)
    c2 = c2 + p["b2"].reshape(1, 1, 1, -1)

    cid = lax.conv_general_dilated(x, p["wid"].reshape(1, 1, Cin, Cout),
                                   (1, 1), "SAME", dimension_numbers=dn)
    cid = cid + p["bid"].reshape(1, 1, 1, -1)
    return jnp.transpose(c2 + cid, (0, 3, 1, 2))


if __name__ == "__main__":
    N, Cin, Cout, H, W = 2, 4, 8, 16, 16

    key = jax.random.PRNGKey(0)
    ks = jax.random.split(key, 9)
    params = {
        "w1":    0.2 * jax.random.normal(ks[0], (3, 3, Cin, Cout), jnp.float32),
        "b1":    0.1 * jax.random.normal(ks[1], (1, Cout), jnp.float32),
        "gamma": 1.0 + 0.1 * jax.random.normal(ks[2], (1, Cout), jnp.float32),
        "beta":  0.1 * jax.random.normal(ks[3], (1, Cout), jnp.float32),
        "w2":    0.2 * jax.random.normal(ks[4], (3, 3, Cout, Cout), jnp.float32),
        "b2":    0.1 * jax.random.normal(ks[5], (1, Cout), jnp.float32),
        "wid":   0.2 * jax.random.normal(ks[6], (Cin, Cout), jnp.float32),
        "bid":   0.1 * jax.random.normal(ks[7], (1, Cout), jnp.float32),
    }
    x = jax.random.normal(ks[8], (N, Cin, H, W), jnp.float32)

    m1s, m2s, pp = prepare_params(params, W)      # one-time constant build
    out = jax.block_until_ready(double_conv(x, m1s, m2s, pp))
    ref = jax.block_until_ready(reference(x, params))

    assert out.shape == (N, Cout, H, W), out.shape
    # bf16 MXU operands (f32 accumulation / BN): tolerance widened vs all-f32.
    assert jnp.allclose(out, ref, atol=5e-2, rtol=5e-2), (
        float(jnp.max(jnp.abs(out - ref))))
    print("KERNEL_OK")
</pallas_src>

<mosaic_0001>
module attributes {stable_mosaic.version = 11 : i64} {
  func.func @double_conv_kernel(%arg0: memref<32x64xf32, #tpu.memory_space<vmem>>, %arg1: memref<192x128xbf16, #tpu.memory_space<vmem>>, %arg2: memref<448x128xbf16, #tpu.memory_space<vmem>>, %arg3: memref<3x128xf32, #tpu.memory_space<vmem>>, %arg4: memref<32x128xf32, #tpu.memory_space<vmem>>) attributes {dimension_semantics = [], scalar_prefetch = 0 : i64, scratch_operands = 0 : i64, tpu.core_type = #tpu.core_type<tc>} {
    %0 = tpu.iota {dimensions = array<i32: 0>} : vector<32x1xi32>
    %c16_i32 = arith.constant 16 : i32
    %c0_i32 = arith.constant 0 : i32
    %1 = arith.cmpi eq, %c16_i32, %c0_i32 : i32
    %c1_i32 = arith.constant 1 : i32
    %2 = arith.select %1, %c1_i32, %c16_i32 : i32
    %3 = vector.broadcast %2 : i32 to vector<32x1xi32>
    %4 = arith.remsi %0, %3 : vector<32x1xi32>
    %c0_i32_0 = arith.constant 0 : i32
    %5 = vector.broadcast %c0_i32_0 : i32 to vector<32x1xi32>
    %6 = arith.cmpi ne, %4, %5 : vector<32x1xi32>
    %c0_i32_1 = arith.constant 0 : i32
    %7 = vector.broadcast %c0_i32_1 : i32 to vector<32x1xi32>
    %8 = arith.cmpi slt, %4, %7 : vector<32x1xi32>
    %c0_i32_2 = arith.constant 0 : i32
    %9 = arith.cmpi slt, %2, %c0_i32_2 : i32
    %10 = vector.broadcast %9 : i1 to vector<32x1xi1>
    %11 = vector.broadcast %10 : vector<32x1xi1> to vector<32x1xi1>
    %12 = arith.xori %8, %11 : vector<32x1xi1>
    %13 = arith.andi %12, %6 : vector<32x1xi1>
    %14 = vector.broadcast %2 : i32 to vector<32x1xi32>
    %15 = arith.addi %4, %14 : vector<32x1xi32>
    %16 = arith.select %13, %15, %4 : vector<32x1xi1>, vector<32x1xi32>
    %c0_i32_3 = arith.constant 0 : i32
    %17 = vector.broadcast %c0_i32_3 : i32 to vector<32x1xi32>
    %18 = arith.cmpi ne, %16, %17 : vector<32x1xi32>
    %c15_i32 = arith.constant 15 : i32
    %19 = vector.broadcast %c15_i32 : i32 to vector<32x1xi32>
    %20 = arith.cmpi ne, %16, %19 : vector<32x1xi32>
    %c0 = arith.constant 0 : index
    %c0_4 = arith.constant 0 : index
    %21 = vector.load %arg0[%c0, %c0_4] : memref<32x64xf32, #tpu.memory_space<vmem>>, vector<32x64xf32>
    %c1_i32_5 = arith.constant 1 : i32
    %22 = tpu.dynamic_rotate %21 by %c1_i32_5 dim 0 : vector<32x64xf32>, i32 -> vector<32x64xf32>
    %cst = arith.constant 0.000000e+00 : f32
    %23 = vector.shape_cast %18 : vector<32x1xi1> to vector<32x1xi1>
    %24 = vector.broadcast %23 : vector<32x1xi1> to vector<32x64xi1>
    %25 = vector.broadcast %cst : f32 to vector<32x64xf32>
    %26 = arith.select %24, %22, %25 : vector<32x64xi1>, vector<32x64xf32>
    %c31_i32 = arith.constant 31 : i32
    %27 = tpu.dynamic_rotate %21 by %c31_i32 dim 0 : vector<32x64xf32>, i32 -> vector<32x64xf32>
    %cst_6 = arith.constant 0.000000e+00 : f32
    %28 = vector.shape_cast %20 : vector<32x1xi1> to vector<32x1xi1>
    %29 = vector.broadcast %28 : vector<32x1xi1> to vector<32x64xi1>
    %30 = vector.broadcast %cst_6 : f32 to vector<32x64xf32>
    %31 = arith.select %29, %27, %30 : vector<32x64xi1>, vector<32x64xf32>
    %32 = tpu.concatenate %26, %21, %31 in 1 : vector<32x64xf32>, vector<32x64xf32>, vector<32x64xf32> -> vector<32x192xf32>
    %33 = arith.truncf %32 : vector<32x192xf32> to vector<32x192xbf16>
    %c0_7 = arith.constant 0 : index
    %c0_8 = arith.constant 0 : index
    %34 = vector.load %arg1[%c0_7, %c0_8] : memref<192x128xbf16, #tpu.memory_space<vmem>>, vector<192x128xbf16>
    %cst_9 = arith.constant dense<0.000000e+00> : vector<32x128xf32>
    %35 = tpu.matmul %33, %34, %cst_9 {dimension_numbers = #tpu.dot_dimension_numbers<[1], [0], [0], [1], [0, 0, 1, 1], [], []>} : vector<32x192xbf16>, vector<192x128xbf16>, vector<32x128xf32> -> vector<32x128xf32>
    %cst_10 = arith.constant dense<0.000000e+00> : vector<128xf32>
    %36 = vector.multi_reduction <add>, %35, %cst_10 [0] : vector<32x128xf32> to vector<128xf32>
    %37 = vector.shape_cast %36 : vector<128xf32> to vector<1x128xf32>
    %38 = arith.mulf %35, %35 : vector<32x128xf32>
    %cst_11 = arith.constant dense<0.000000e+00> : vector<128xf32>
    %39 = vector.multi_reduction <add>, %38, %cst_11 [0] : vector<32x128xf32> to vector<128xf32>
    %40 = vector.shape_cast %39 : vector<128xf32> to vector<1x128xf32>
    %41 = tpu.concatenate %37, %40 in 0 : vector<1x128xf32>, vector<1x128xf32> -> vector<2x128xf32>
    %c8_i32 = arith.constant 8 : i32
    %42 = tpu.dynamic_rotate %41 by %c8_i32 dim 1 : vector<2x128xf32>, i32 -> vector<2x128xf32>
    %43 = arith.addf %41, %42 : vector<2x128xf32>
    %c16_i32_12 = arith.constant 16 : i32
    %44 = tpu.dynamic_rotate %43 by %c16_i32_12 dim 1 : vector<2x128xf32>, i32 -> vector<2x128xf32>
    %45 = arith.addf %43, %44 : vector<2x128xf32>
    %c32_i32 = arith.constant 32 : i32
    %46 = tpu.dynamic_rotate %45 by %c32_i32 dim 1 : vector<2x128xf32>, i32 -> vector<2x128xf32>
    %47 = arith.addf %45, %46 : vector<2x128xf32>
    %c64_i32 = arith.constant 64 : i32
    %48 = tpu.dynamic_rotate %47 by %c64_i32 dim 1 : vector<2x128xf32>, i32 -> vector<2x128xf32>
    %49 = arith.addf %47, %48 : vector<2x128xf32>
    %50 = vector.extract_strided_slice %49 {offsets = [0, 0], sizes = [1, 128], strides = [1, 1]} : vector<2x128xf32> to vector<1x128xf32>
    %cst_13 = arith.constant 0.001953125 : f32
    %51 = vector.broadcast %cst_13 : f32 to vector<1x128xf32>
    %52 = arith.mulf %50, %51 : vector<1x128xf32>
    %53 = vector.extract_strided_slice %49 {offsets = [1, 0], sizes = [1, 128], strides = [1, 1]} : vector<2x128xf32> to vector<1x128xf32>
    %cst_14 = arith.constant 0.001953125 : f32
    %54 = vector.broadcast %cst_14 : f32 to vector<1x128xf32>
    %55 = arith.mulf %53, %54 : vector<1x128xf32>
    %56 = arith.mulf %52, %52 : vector<1x128xf32>
    %57 = arith.subf %55, %56 : vector<1x128xf32>
    %c0_15 = arith.constant 0 : index
    %c0_16 = arith.constant 0 : index
    %58 = vector.load %arg3[%c0_15, %c0_16] : memref<3x128xf32, #tpu.memory_space<vmem>>, vector<1x128xf32>
    %cst_17 = arith.constant 9.99999974E-6 : f32
    %59 = vector.broadcast %cst_17 : f32 to vector<1x128xf32>
    %60 = arith.addf %57, %59 : vector<1x128xf32>
    %61 = math.rsqrt %60 : vector<1x128xf32>
    %62 = arith.mulf %58, %61 : vector<1x128xf32>
    %c1 = arith.constant 1 : index
    %c0_18 = arith.constant 0 : index
    %63 = vector.load %arg3[%c1, %c0_18] : memref<3x128xf32, #tpu.memory_space<vmem>>, vector<1x128xf32>
    %64 = arith.mulf %52, %62 : vector<1x128xf32>
    %65 = arith.subf %63, %64 : vector<1x128xf32>
    %66 = vector.broadcast %62 : vector<1x128xf32> to vector<32x128xf32>
    %67 = arith.mulf %35, %66 : vector<32x128xf32>
    %68 = vector.broadcast %65 : vector<1x128xf32> to vector<32x128xf32>
    %69 = arith.addf %67, %68 : vector<32x128xf32>
    %cst_19 = arith.constant 0.000000e+00 : f32
    %70 = vector.broadcast %cst_19 : f32 to vector<32x128xf32>
    %71 = arith.maximumf %69, %70 : vector<32x128xf32>
    %c1_i32_20 = arith.constant 1 : i32
    %72 = tpu.dynamic_rotate %71 by %c1_i32_20 dim 0 : vector<32x128xf32>, i32 -> vector<32x128xf32>
    %cst_21 = arith.constant 0.000000e+00 : f32
    %73 = vector.shape_cast %18 : vector<32x1xi1> to vector<32x1xi1>
    %74 = vector.broadcast %73 : vector<32x1xi1> to vector<32x128xi1>
    %75 = vector.broadcast %cst_21 : f32 to vector<32x128xf32>
    %76 = arith.select %74, %72, %75 : vector<32x128xi1>, vector<32x128xf32>
    %c31_i32_22 = arith.constant 31 : i32
    %77 = tpu.dynamic_rotate %71 by %c31_i32_22 dim 0 : vector<32x128xf32>, i32 -> vector<32x128xf32>
    %cst_23 = arith.constant 0.000000e+00 : f32
    %78 = vector.shape_cast %20 : vector<32x1xi1> to vector<32x1xi1>
    %79 = vector.broadcast %78 : vector<32x1xi1> to vector<32x128xi1>
    %80 = vector.broadcast %cst_23 : f32 to vector<32x128xf32>
    %81 = arith.select %79, %77, %80 : vector<32x128xi1>, vector<32x128xf32>
    %82 = tpu.concatenate %76, %71, %81, %21 in 1 : vector<32x128xf32>, vector<32x128xf32>, vector<32x128xf32>, vector<32x64xf32> -> vector<32x448xf32>
    %83 = arith.truncf %82 : vector<32x448xf32> to vector<32x448xbf16>
    %c0_24 = arith.constant 0 : index
    %c0_25 = arith.constant 0 : index
    %84 = vector.load %arg2[%c0_24, %c0_25] : memref<448x128xbf16, #tpu.memory_space<vmem>>, vector<448x128xbf16>
    %cst_26 = arith.constant dense<0.000000e+00> : vector<32x128xf32>
    %85 = tpu.matmul %83, %84, %cst_26 {dimension_numbers = #tpu.dot_dimension_numbers<[1], [0], [0], [1], [0, 0, 1, 1], [], []>} : vector<32x448xbf16>, vector<448x128xbf16>, vector<32x128xf32> -> vector<32x128xf32>
    %c2 = arith.constant 2 : index
    %c0_27 = arith.constant 0 : index
    %86 = vector.load %arg3[%c2, %c0_27] : memref<3x128xf32, #tpu.memory_space<vmem>>, vector<1x128xf32>
    %87 = vector.broadcast %86 : vector<1x128xf32> to vector<32x128xf32>
    %88 = arith.addf %85, %87 : vector<32x128xf32>
    %c0_28 = arith.constant 0 : index
    %c0_29 = arith.constant 0 : index
    %89 = vector.load %arg4[%c0_28, %c0_29] : memref<32x128xf32, #tpu.memory_space<vmem>>, vector<32x128xf32>
    tpu.vector_store %arg4[%c0_28, %c0_29], %88 {strides = array<i32>} : memref<32x128xf32, #tpu.memory_space<vmem>>, vector<32x128xf32>,
    return
  }
}

</mosaic_0001>

<llo_original>
// kernel: double_conv.1
$region0: #{double_conv.1}
  #allocation0 [shape = 'u32[]', space=smem, size = 0x4, offset = 0x4, fixed_abs, tag = 'smem constant byte address 0x4 - core index']
  #allocation1 [shape = 'u32[72,128]{1,0:T(1,128)}', space=vmem, size = 0x9000, scoped, tag = 'internal scratch']
  %s0 = inlined_call_operand.vmem [shape: f32[32,64], index: 0, kind: input, shape index: {}]
  %s1 = inlined_call_operand.vmem [shape: bf16[192,128], index: 1, kind: input, shape index: {}]
  %s2 = inlined_call_operand.vmem [shape: bf16[448,128], index: 2, kind: input, shape index: {}]
  %s3 = inlined_call_operand.vmem [shape: f32[3,128], index: 3, kind: input, shape index: {}]
  %s4 = inlined_call_operand.vmem [shape: f32[32,128], index: 4, kind: output, shape index: {}]
  %s5 = sld [smem:[#allocation0]]
  $region26: #{double_conv.1} parent=0
    _
  %s7 = ssub.s32 1, %s5
  %s8 = scalar_select 0, %s7, %s5
  // Predicated region
  $region2: #{double_conv.1} parent=0 // pred_check
    _
  $region3: #{double_conv.1} parent=0 // pred_check_branch
    %10 = sbr.rel (0) target = $region5
  $region4: #{double_conv.1} parent=0 // pred_region
    _
  $region5: #{double_conv.1} parent=0 // pred_fallthru
    _
  // Predicated region
  $region6: #{double_conv.1} parent=0 // pred_check
    _
  $region7: #{double_conv.1} parent=0 // pred_check_branch
    %12 = sbr.rel (0) target = $region9
  $region8: #{double_conv.1} parent=0 // pred_region
    _
  $region9: #{double_conv.1} parent=0 // pred_fallthru
    _
  // Predicated region
  $region10: #{double_conv.1} parent=0 // pred_check
    _
  $region11: #{double_conv.1} parent=0 // pred_check_branch
    %14 = sbr.rel (0) target = $region13
  $region12: #{double_conv.1} parent=0 // pred_region
    _
  $region13: #{double_conv.1} parent=0 // pred_fallthru
    _
  // Predicated region
  $region14: #{double_conv.1} parent=0 // pred_check
    _
  $region15: #{double_conv.1} parent=0 // pred_check_branch
    %16 = sbr.rel (0) target = $region17
  $region16: #{double_conv.1} parent=0 // pred_region
    _
  $region17: #{double_conv.1} parent=0 // pred_fallthru
    _
  %v18 = vlaneseq
  %v19 = vshrl.u32 %v18, 7
  %v20 = vadd.s32 %v19, 8
  %v21 = vadd.s32 %v19, 16
  %v22 = vadd.s32 %v19, 24
  %vm23 = vcmp.lt.s32.totalorder %v19, 0
  %v24 = vsub.s32 0, %v19
  %v25 = vsel %vm23, %v24, %v19
  %v26 = vshrl.u32 %v25, 4
  %v27 = vand.u32 %v25, 15
  %v28 = vsub.s32 0, %v27
  %v29 = vsel %vm23, %v28, %v27
  %vm30 = vcmp.lt.s32.totalorder %v20, 0
  %v31 = vsub.s32 0, %v20
  %v32 = vsel %vm30, %v31, %v20
  %v33 = vshrl.u32 %v32, 4
  %v34 = vand.u32 %v32, 15
  %v35 = vsub.s32 0, %v34
  %v36 = vsel %vm30, %v35, %v34
  %vm37 = vcmp.lt.s32.totalorder %v21, 0
  %v38 = vsub.s32 0, %v21
  %v39 = vsel %vm37, %v38, %v21
  %v40 = vshrl.u32 %v39, 4
  %v41 = vand.u32 %v39, 15
  %v42 = vsub.s32 0, %v41
  %v43 = vsel %vm37, %v42, %v41
  %vm44 = vcmp.lt.s32.totalorder %v22, 0
  %v45 = vsub.s32 0, %v22
  %v46 = vsel %vm44, %v45, %v22
  %v47 = vshrl.u32 %v46, 4
  %v48 = vand.u32 %v46, 15
  %v49 = vsub.s32 0, %v48
  %v50 = vsel %vm44, %v49, %v48
  %vm51 = vcmp.ne.s32.totalorder %v29, 0
  %vm52 = vcmp.ne.s32.totalorder %v36, 0
  %vm53 = vcmp.ne.s32.totalorder %v43, 0
  %vm54 = vcmp.ne.s32.totalorder %v50, 0
  %vm55 = vcmp.lt.s32.totalorder %v29, 0
  %vm56 = vcmp.lt.s32.totalorder %v36, 0
  %vm57 = vcmp.lt.s32.totalorder %v43, 0
  %vm58 = vcmp.lt.s32.totalorder %v50, 0
  %vm59 = vmand %vm55, %vm51
  %vm60 = vmand %vm56, %vm52
  %vm61 = vmand %vm57, %vm53
  %vm62 = vmand %vm58, %vm54
  %v63 = vadd.s32 %v29, 16
  %v64 = vadd.s32 %v36, 16
  %v65 = vadd.s32 %v43, 16
  %v66 = vadd.s32 %v50, 16
  %v67 = vsel %vm59, %v63, %v29
  %v68 = vsel %vm60, %v64, %v36
  %v69 = vsel %vm61, %v65, %v43
  %v70 = vsel %vm62, %v66, %v50
  %vm71 = vcmp.ne.s32.totalorder %v67, 0
  %vm72 = vcmp.ne.s32.totalorder %v68, 0
  %vm73 = vcmp.ne.s32.totalorder %v69, 0
  %vm74 = vcmp.ne.s32.totalorder %v70, 0
  %vm75 = vcmp.ne.s32.totalorder %v67, 15
  %vm76 = vcmp.ne.s32.totalorder %v68, 15
  %vm77 = vcmp.ne.s32.totalorder %v69, 15
  %vm78 = vcmp.ne.s32.totalorder %v70, 15
  %v79 = vld [vmem:[%s0] sm:$0xff]
  %v80 = vld [vmem:[%s0 + $0x8] sm:$0xff]
  %v81 = vld [vmem:[%s0 + $0x10] sm:$0xff]
  %v82 = vld [vmem:[%s0 + $0x18] sm:$0xff]
  %v83 = vrot.slane %v79, 7
  %v84 = vrot.slane %v80, 7
  %v85 = vrot.slane %v81, 7
  %v86 = vrot.slane %v82, 7
  %vm87 = vcmp.lt.s32.totalorder %v19, 1
  %v88 = vsel %vm87, %v85, %v86
  %v89 = vsel %vm87, %v84, %v85
  %v90 = vsel %vm87, %v83, %v84
  %v91 = vsel %vm87, %v86, %v83
  %v92 = vsel %vm71, 1, 0
  %v93 = vsel %vm72, 1, 0
  %v94 = vsel %vm73, 1, 0
  %v95 = vsel %vm74, 1, 0
  %vm96 = vcmp.eq.s32.totalorder %v92, 1
  %vm97 = vcmp.eq.s32.totalorder %v93, 1
  %vm98 = vcmp.eq.s32.totalorder %v94, 1
  %vm99 = vcmp.eq.s32.totalorder %v95, 1
  %v100 = vsel %vm96, %v91, 0.0
  %v101 = vsel %vm97, %v90, 0.0
  %v102 = vsel %vm98, %v89, 0.0
  %v103 = vsel %vm99, %v88, 0.0
  %v104 = vrot.slane %v79, 1
  %v105 = vrot.slane %v80, 1
  %v106 = vrot.slane %v81, 1
  %v107 = vrot.slane %v82, 1
  %vm108 = vcmp.lt.s32.totalorder %v19, 7
  %v109 = vsel %vm108, %v106, %v107
  %v110 = vsel %vm108, %v105, %v106
  %v111 = vsel %vm108, %v104, %v105
  %v112 = vsel %vm108, %v107, %v104
  %v113 = vsel %vm75, 1, 0
  %v114 = vsel %vm76, 1, 0
  %v115 = vsel %vm77, 1, 0
  %v116 = vsel %vm78, 1, 0
  %vm117 = vcmp.eq.s32.totalorder %v113, 1
  %vm118 = vcmp.eq.s32.totalorder %v114, 1
  %vm119 = vcmp.eq.s32.totalorder %v115, 1
  %vm120 = vcmp.eq.s32.totalorder %v116, 1
  %v121 = vsel %vm117, %v111, 0.0
  %v122 = vsel %vm118, %v110, 0.0
  %v123 = vsel %vm119, %v109, 0.0
  %v124 = vsel %vm120, %v112, 0.0
  %129 = vrot.lane.b32.xlu0 %v79, 64
  %v130 = vpop.permute.xlu0 %129
  %131 = vrot.lane.b32.xlu0 %v80, 64
  %v132 = vpop.permute.xlu0 %131
  %133 = vrot.lane.b32.xlu0 %v81, 64
  %v134 = vpop.permute.xlu0 %133
  %135 = vrot.lane.b32.xlu0 %v82, 64
  %v136 = vpop.permute.xlu0 %135
  %vm141 = vcmask 523264
  %v142 = vsel %vm141, %v100, %v130
  %v143 = vsel %vm141, %v101, %v132
  %v144 = vsel %vm141, %v102, %v134
  %v145 = vsel %vm141, %v103, %v136
  %v146 = vpack.c.bf16 %v143, %v142
  %v147 = vpack.c.bf16 %v122, %v121
  %v148 = vpack.c.bf16 %v145, %v144
  %v149 = vpack.c.bf16 %v124, %v123
  %v150 = vld [vmem:[%s1] sm:$0xf]
  %v151 = vld [vmem:[%s1 + $0x4] sm:$0xf]
  %v152 = vld [vmem:[%s1 + $0x8] sm:$0xf]
  %v153 = vld [vmem:[%s1 + $0xc] sm:$0xf]
  %v154 = vld [vmem:[%s1 + $0x10] sm:$0xf]
  %v155 = vld [vmem:[%s1 + $0x14] sm:$0xf]
  %v156 = vld [vmem:[%s1 + $0x18] sm:$0xf]
  %v157 = vld [vmem:[%s1 + $0x1c] sm:$0xf]
  %v158 = vld [vmem:[%s1 + $0x20] sm:$0xf]
  %v159 = vld [vmem:[%s1 + $0x24] sm:$0xf]
  %v160 = vld [vmem:[%s1 + $0x28] sm:$0xf]
  %v161 = vld [vmem:[%s1 + $0x2c] sm:$0xf]
  %v162 = vld [vmem:[%s1 + $0x30] sm:$0xf]
  %v163 = vld [vmem:[%s1 + $0x34] sm:$0xf]
  %v164 = vld [vmem:[%s1 + $0x38] sm:$0xf]
  %v165 = vld [vmem:[%s1 + $0x3c] sm:$0xf]
  %v166 = vld [vmem:[%s1 + $0x40] sm:$0xf]
  %v167 = vld [vmem:[%s1 + $0x44] sm:$0xf]
  %v168 = vld [vmem:[%s1 + $0x48] sm:$0xf]
  %v169 = vld [vmem:[%s1 + $0x4c] sm:$0xf]
  %v170 = vld [vmem:[%s1 + $0x50] sm:$0xf]
  %v171 = vld [vmem:[%s1 + $0x54] sm:$0xf]
  %v172 = vld [vmem:[%s1 + $0x58] sm:$0xf]
  %v173 = vld [vmem:[%s1 + $0x5c] sm:$0xf]
  %v198 = vunpack.c.l.b16 %v150
  %v199 = vunpack.c.l.b16 %v151
  %v200 = vunpack.c.l.b16 %v152
  %v201 = vunpack.c.l.b16 %v153
  %v202 = vunpack.c.l.b16 %v154
  %v203 = vunpack.c.l.b16 %v155
  %v204 = vunpack.c.l.b16 %v156
  %v205 = vunpack.c.l.b16 %v157
  %v206 = vunpack.c.l.b16 %v158
  %v207 = vunpack.c.l.b16 %v159
  %v208 = vunpack.c.l.b16 %v160
  %v209 = vunpack.c.l.b16 %v161
  %v210 = vunpack.c.l.b16 %v162
  %v211 = vunpack.c.l.b16 %v163
  %v212 = vunpack.c.l.b16 %v164
  %v213 = vunpack.c.l.b16 %v165
  %v214 = vunpack.c.l.b16 %v166
  %v215 = vunpack.c.l.b16 %v167
  %v216 = vunpack.c.l.b16 %v168
  %v217 = vunpack.c.l.b16 %v169
  %v218 = vunpack.c.l.b16 %v170
  %v219 = vunpack.c.l.b16 %v171
  %v220 = vunpack.c.l.b16 %v172
  %v221 = vunpack.c.l.b16 %v173
  %v222 = vpack.c.b16 %v199, %v198
  %v223 = vpack.c.b16 %v201, %v200
  %v224 = vpack.c.b16 %v203, %v202
  %v225 = vpack.c.b16 %v205, %v204
  %v226 = vpack.c.b16 %v207, %v206
  %v227 = vpack.c.b16 %v209, %v208
  %v228 = vpack.c.b16 %v211, %v210
  %v229 = vpack.c.b16 %v213, %v212
  %v230 = vpack.c.b16 %v215, %v214
  %v231 = vpack.c.b16 %v217, %v216
  %v232 = vpack.c.b16 %v219, %v218
  %v233 = vpack.c.b16 %v221, %v220
  %v247 = vsel %vm141, %v147, 0
  %v250 = vsel %vm141, %v149, 0
  %252 = vmatpush.bf16.msra.mxu0 %v229
  %253 = vmatpush.bf16.msra.mxu0 %v228
  %254 = vmatpush.bf16.msra.mxu0 %v227
  %255 = vmatpush.bf16.msra.mxu0 %v226
  %256 = vmatpush.bf16.msra.mxu0 %v225
  %257 = vmatpush.bf16.msra.mxu0 %v224
  %258 = vmatpush.bf16.msra.mxu0 %v223
  %259 = vmatpush.bf16.msra.mxu0 %v222
  %260 = vmatmul.bf16.gmra.mxu0 %v146
  %v261 = vpop.f32.mrf.mxu0
  %v262 = vadd.f32 0.0, %v261
  %v263 = vpop.f32.mrf.mxu0
  %v264 = vadd.f32 0.0, %v263
  %265 = vmatmul.bf16.gmra.mxu0 %v148
  %v266 = vpop.f32.mrf.mxu0
  %v267 = vadd.f32 0.0, %v266
  %v268 = vpop.f32.mrf.mxu0
  %v269 = vadd.f32 0.0, %v268
  %270 = vdwg.mxu0
  %271 = vmatpush.bf16.msra.mxu0 0
  %272 = vmatpush.bf16.msra.mxu0 0
  %273 = vmatpush.bf16.msra.mxu0 0
  %274 = vmatpush.bf16.msra.mxu0 0
  %275 = vmatpush.bf16.msra.mxu0 %v233
  %276 = vmatpush.bf16.msra.mxu0 %v232
  %277 = vmatpush.bf16.msra.mxu0 %v231
  %278 = vmatpush.bf16.msra.mxu0 %v230
  %279 = vmatmul.bf16.gmra.mxu0 %v247
  %v280 = vpop.f32.mrf.mxu0
  %v281 = vadd.f32 %v262, %v280
  %v282 = vpop.f32.mrf.mxu0
  %v283 = vadd.f32 %v264, %v282
  %284 = vmatmul.bf16.gmra.mxu0 %v250
  %v285 = vpop.f32.mrf.mxu0
  %v286 = vadd.f32 %v267, %v285
  %v287 = vpop.f32.mrf.mxu0
  %v288 = vadd.f32 %v269, %v287
  %289 = vdwg.mxu0
  %v290 = vadd.f32 %v281, %v283
  %v291 = vadd.f32 %v290, %v286
  %v292 = vadd.f32 %v291, %v288
  %v293 = vrot.slane %v292, 4
  %v294 = vadd.f32 %v292, %v293
  %v295 = vrot.slane %v294, 2
  %v296 = vadd.f32 %v294, %v295
  %v297 = vrot.slane %v296, 1
  %v298 = vadd.f32 %v296, %v297
  %v299 = vmul.f32 %v281, %v281
  %v300 = vmul.f32 %v283, %v283
  %v301 = vmul.f32 %v286, %v286
  %v302 = vmul.f32 %v288, %v288
  %v303 = vadd.f32 %v299, %v300
  %v304 = vadd.f32 %v303, %v301
  %v305 = vadd.f32 %v304, %v302
  %v306 = vrot.slane %v305, 4
  %v307 = vadd.f32 %v305, %v306
  %v308 = vrot.slane %v307, 2
  %v309 = vadd.f32 %v307, %v308
  %v310 = vrot.slane %v309, 1
  %v311 = vadd.f32 %v309, %v310
  %vm312 = vcmask 1040384
  %v313 = vsel %vm312, %v298, %v311
  %314 = vrot.lane.b32.xlu0 %v313, 8
  %v315 = vpop.permute.xlu0 %314
  %v316 = vadd.f32 %v313, %v315
  %317 = vrot.lane.b32.xlu0 %v316, 16
  %v318 = vpop.permute.xlu0 %317
  %v319 = vadd.f32 %v316, %v318
  %320 = vrot.lane.b32.xlu0 %v319, 32
  %v321 = vpop.permute.xlu0 %320
  %v322 = vadd.f32 %v319, %v321
  %323 = vrot.lane.b32.xlu0 %v322, 64
  %v324 = vpop.permute.xlu0 %323
  %v325 = vadd.f32 %v322, %v324
  %v326 = vmul.f32 %v325, 0.001953125
  %v327 = vmul.f32 %v326, %v326
  %v329 = vrot.slane %v327, 7
  %v331 = vsub.f32 %v326, %v329
  %v332 = vld [vmem:[%s3] sm:$0x1]
  %v333 = vadd.f32 %v331, 1e-05
  %v334 = vrsqrt.pop %v333
  %v335 = vmul.f32 %v334, %v333
  %v336 = vmul.f32 %v335, %v334
  %v337 = vmul.f32 0.5, %v336
  %v338 = vsub.f32 1.5, %v337
  %v339 = vmul.f32 %v334, %v338
  %vm340 = vweird.f32 %v333
  %vm341 = vweird.f32 %v334
  %vm342 = vmor %vm340, %vm341
  %v343 = vsel %vm342, %v334, %v339
  %v345 = vrot.slane %v343, 1
  %v347 = vmul.f32 %v332, %v345
  %v348 = vld [vmem:[%s3 + $0x1] sm:$0x1]
  %v349 = vmul.f32 %v326, %v347
  %v350 = vsub.f32 %v348, %v349
  %v351 = vperm.slane %v347, 0
  %v352 = vmul.f32 %v281, %v351
  %v353 = vmul.f32 %v283, %v351
  %v354 = vmul.f32 %v286, %v351
  %v355 = vmul.f32 %v288, %v351
  %v356 = vperm.slane %v350, 0
  %v357 = vadd.f32 %v352, %v356
  %v358 = vadd.f32 %v353, %v356
  %v359 = vadd.f32 %v354, %v356
  %v360 = vadd.f32 %v355, %v356
  %v361 = vmax.f32 %v357, 0.0
  %v362 = vmax.f32 %v358, 0.0
  %v363 = vmax.f32 %v359, 0.0
  %v364 = vmax.f32 %v360, 0.0
  %v365 = vrot.slane %v361, 7
  %v366 = vrot.slane %v362, 7
  %v367 = vrot.slane %v363, 7
  %v368 = vrot.slane %v364, 7
  %v369 = vsel %vm87, %v367, %v368
  %v370 = vsel %vm87, %v366, %v367
  %v371 = vsel %vm87, %v365, %v366
  %v372 = vsel %vm87, %v368, %v365
  %v373 = vsel %vm96, %v372, 0.0
  %v374 = vsel %vm97, %v371, 0.0
  %v375 = vsel %vm98, %v370, 0.0
  %v376 = vsel %vm99, %v369, 0.0
  %v377 = vrot.slane %v361, 1
  %v378 = vrot.slane %v362, 1
  %v379 = vrot.slane %v363, 1
  %v380 = vrot.slane %v364, 1
  %v381 = vsel %vm108, %v379, %v380
  %v382 = vsel %vm108, %v378, %v379
  %v383 = vsel %vm108, %v377, %v378
  %v384 = vsel %vm108, %v380, %v377
  %v385 = vsel %vm117, %v383, 0.0
  %v386 = vsel %vm118, %v382, 0.0
  %v387 = vsel %vm119, %v381, 0.0
  %v388 = vsel %vm120, %v384, 0.0
  %v389 = vpack.c.bf16 %v374, %v373
  %v390 = vpack.c.bf16 %v362, %v361
  %v391 = vpack.c.bf16 %v386, %v385
  %v392 = vpack.c.bf16 %v80, %v79
  %v393 = vpack.c.bf16 %v376, %v375
  %v394 = vpack.c.bf16 %v364, %v363
  %v395 = vpack.c.bf16 %v388, %v387
  %v396 = vpack.c.bf16 %v82, %v81
  %v397 = vld [vmem:[%s2] sm:$0xf]
  %v398 = vld [vmem:[%s2 + $0x4] sm:$0xf]
  %v399 = vld [vmem:[%s2 + $0x8] sm:$0xf]
  %v400 = vld [vmem:[%s2 + $0xc] sm:$0xf]
  %v401 = vld [vmem:[%s2 + $0x10] sm:$0xf]
  %v402 = vld [vmem:[%s2 + $0x14] sm:$0xf]
  %v403 = vld [vmem:[%s2 + $0x18] sm:$0xf]
  %v404 = vld [vmem:[%s2 + $0x1c] sm:$0xf]
  %v405 = vld [vmem:[%s2 + $0x20] sm:$0xf]
  %v406 = vld [vmem:[%s2 + $0x24] sm:$0xf]
  %v407 = vld [vmem:[%s2 + $0x28] sm:$0xf]
  %v408 = vld [vmem:[%s2 + $0x2c] sm:$0xf]
  %v409 = vld [vmem:[%s2 + $0x30] sm:$0xf]
  %v410 = vld [vmem:[%s2 + $0x34] sm:$0xf]
  %v411 = vld [vmem:[%s2 + $0x38] sm:$0xf]
  %v412 = vld [vmem:[%s2 + $0x3c] sm:$0xf]
  %v413 = vld [vmem:[%s2 + $0x40] sm:$0xf]
  %v414 = vld [vmem:[%s2 + $0x44] sm:$0xf]
  %v415 = vld [vmem:[%s2 + $0x48] sm:$0xf]
  %v416 = vld [vmem:[%s2 + $0x4c] sm:$0xf]
  %v417 = vld [vmem:[%s2 + $0x50] sm:$0xf]
  %v418 = vld [vmem:[%s2 + $0x54] sm:$0xf]
  %v419 = vld [vmem:[%s2 + $0x58] sm:$0xf]
  %v420 = vld [vmem:[%s2 + $0x5c] sm:$0xf]
  %v421 = vld [vmem:[%s2 + $0x60] sm:$0xf]
  %v422 = vld [vmem:[%s2 + $0x64] sm:$0xf]
  %v423 = vld [vmem:[%s2 + $0x68] sm:$0xf]
  %v424 = vld [vmem:[%s2 + $0x6c] sm:$0xf]
  %v425 = vld [vmem:[%s2 + $0x70] sm:$0xf]
  %v426 = vld [vmem:[%s2 + $0x74] sm:$0xf]
  %v427 = vld [vmem:[%s2 + $0x78] sm:$0xf]
  %v428 = vld [vmem:[%s2 + $0x7c] sm:$0xf]
  %v429 = vld [vmem:[%s2 + $0x80] sm:$0xf]
  %v430 = vld [vmem:[%s2 + $0x84] sm:$0xf]
  %v431 = vld [vmem:[%s2 + $0x88] sm:$0xf]
  %v432 = vld [vmem:[%s2 + $0x8c] sm:$0xf]
  %v433 = vld [vmem:[%s2 + $0x90] sm:$0xf]
  %v434 = vld [vmem:[%s2 + $0x94] sm:$0xf]
  %v435 = vld [vmem:[%s2 + $0x98] sm:$0xf]
  %v436 = vld [vmem:[%s2 + $0x9c] sm:$0xf]
  %v437 = vld [vmem:[%s2 + $0xa0] sm:$0xf]
  %v438 = vld [vmem:[%s2 + $0xa4] sm:$0xf]
  %v439 = vld [vmem:[%s2 + $0xa8] sm:$0xf]
  %v440 = vld [vmem:[%s2 + $0xac] sm:$0xf]
  %v441 = vld [vmem:[%s2 + $0xb0] sm:$0xf]
  %v442 = vld [vmem:[%s2 + $0xb4] sm:$0xf]
  %v443 = vld [vmem:[%s2 + $0xb8] sm:$0xf]
  %v444 = vld [vmem:[%s2 + $0xbc] sm:$0xf]
  %v445 = vld [vmem:[%s2 + $0xc0] sm:$0xf]
  %v446 = vld [vmem:[%s2 + $0xc4] sm:$0xf]
  %v447 = vld [vmem:[%s2 + $0xc8] sm:$0xf]
  %v448 = vld [vmem:[%s2 + $0xcc] sm:$0xf]
  %v449 = vld [vmem:[%s2 + $0xd0] sm:$0xf]
  %v450 = vld [vmem:[%s2 + $0xd4] sm:$0xf]
  %v451 = vld [vmem:[%s2 + $0xd8] sm:$0xf]
  %v452 = vld [vmem:[%s2 + $0xdc] sm:$0xf]
  %v453 = vld [vmem:[%s3 + $0x2] sm:$0x1]
  %v454 = vperm.slane %v453, 0
  %v511 = vunpack.c.l.b16 %v397
  %v512 = vunpack.c.l.b16 %v398
  %v513 = vunpack.c.l.b16 %v399
  %v514 = vunpack.c.l.b16 %v400
  %v515 = vunpack.c.l.b16 %v401
  %v516 = vunpack.c.l.b16 %v402
  %v517 = vunpack.c.l.b16 %v403
  %v518 = vunpack.c.l.b16 %v404
  %v519 = vunpack.c.l.b16 %v405
  %v520 = vunpack.c.l.b16 %v406
  %v521 = vunpack.c.l.b16 %v407
  %v522 = vunpack.c.l.b16 %v408
  %v523 = vunpack.c.l.b16 %v409
  %v524 = vunpack.c.l.b16 %v410
  %v525 = vunpack.c.l.b16 %v411
  %v526 = vunpack.c.l.b16 %v412
  %v527 = vunpack.c.l.b16 %v413
  %v528 = vunpack.c.l.b16 %v414
  %v529 = vunpack.c.l.b16 %v415
  %v530 = vunpack.c.l.b16 %v416
  %v531 = vunpack.c.l.b16 %v417
  %v532 = vunpack.c.l.b16 %v418
  %v533 = vunpack.c.l.b16 %v419
  %v534 = vunpack.c.l.b16 %v420
  %v535 = vunpack.c.l.b16 %v421
  %v536 = vunpack.c.l.b16 %v422
  %v537 = vunpack.c.l.b16 %v423
  %v538 = vunpack.c.l.b16 %v424
  %v539 = vunpack.c.l.b16 %v425
  %v540 = vunpack.c.l.b16 %v426
  %v541 = vunpack.c.l.b16 %v427
  %v542 = vunpack.c.l.b16 %v428
  %v543 = vunpack.c.l.b16 %v429
  %v544 = vunpack.c.l.b16 %v430
  %v545 = vunpack.c.l.b16 %v431
  %v546 = vunpack.c.l.b16 %v432
  %v547 = vunpack.c.l.b16 %v433
  %v548 = vunpack.c.l.b16 %v434
  %v549 = vunpack.c.l.b16 %v435
  %v550 = vunpack.c.l.b16 %v436
  %v551 = vunpack.c.l.b16 %v437
  %v552 = vunpack.c.l.b16 %v438
  %v553 = vunpack.c.l.b16 %v439
  %v554 = vunpack.c.l.b16 %v440
  %v555 = vunpack.c.l.b16 %v441
  %v556 = vunpack.c.l.b16 %v442
  %v557 = vunpack.c.l.b16 %v443
  %v558 = vunpack.c.l.b16 %v444
  %v559 = vunpack.c.l.b16 %v445
  %v560 = vunpack.c.l.b16 %v446
  %v561 = vunpack.c.l.b16 %v447
  %v562 = vunpack.c.l.b16 %v448
  %v563 = vunpack.c.l.b16 %v449
  %v564 = vunpack.c.l.b16 %v450
  %v565 = vunpack.c.l.b16 %v451
  %v566 = vunpack.c.l.b16 %v452
  %v567 = vpack.c.b16 %v512, %v511
  %v568 = vpack.c.b16 %v514, %v513
  %v569 = vpack.c.b16 %v516, %v515
  %v570 = vpack.c.b16 %v518, %v517
  %v571 = vpack.c.b16 %v520, %v519
  %v572 = vpack.c.b16 %v522, %v521
  %v573 = vpack.c.b16 %v524, %v523
  %v574 = vpack.c.b16 %v526, %v525
  %v575 = vpack.c.b16 %v528, %v527
  %v576 = vpack.c.b16 %v530, %v529
  %v577 = vpack.c.b16 %v532, %v531
  %v578 = vpack.c.b16 %v534, %v533
  %v579 = vpack.c.b16 %v536, %v535
  %v580 = vpack.c.b16 %v538, %v537
  %v581 = vpack.c.b16 %v540, %v539
  %v582 = vpack.c.b16 %v542, %v541
  %v583 = vpack.c.b16 %v544, %v543
  %v584 = vpack.c.b16 %v546, %v545
  %v585 = vpack.c.b16 %v548, %v547
  %v586 = vpack.c.b16 %v550, %v549
  %v587 = vpack.c.b16 %v552, %v551
  %v588 = vpack.c.b16 %v554, %v553
  %v589 = vpack.c.b16 %v556, %v555
  %v590 = vpack.c.b16 %v558, %v557
  %v591 = vpack.c.b16 %v560, %v559
  %v592 = vpack.c.b16 %v562, %v561
  %v593 = vpack.c.b16 %v564, %v563
  %v594 = vpack.c.b16 %v566, %v565
  %v624 = vsel %vm141, %v392, 0
  %v627 = vsel %vm141, %v396, 0
  %629 = vmatpush.bf16.msra.mxu0 %v574
  %630 = vmatpush.bf16.msra.mxu0 %v573
  %631 = vmatpush.bf16.msra.mxu0 %v572
  %632 = vmatpush.bf16.msra.mxu0 %v571
  %633 = vmatpush.bf16.msra.mxu0 %v570
  %634 = vmatpush.bf16.msra.mxu0 %v569
  %635 = vmatpush.bf16.msra.mxu0 %v568
  %636 = vmatpush.bf16.msra.mxu0 %v567
  %637 = vmatmul.bf16.gmra.mxu0 %v389
  %v638 = vpop.f32.mrf.mxu0
  %v639 = vadd.f32 %v454, %v638
  %v640 = vpop.f32.mrf.mxu0
  %v641 = vadd.f32 %v454, %v640
  %642 = vmatmul.bf16.gmra.mxu0 %v393
  %v643 = vpop.f32.mrf.mxu0
  %v644 = vadd.f32 %v454, %v643
  %v645 = vpop.f32.mrf.mxu0
  %v646 = vadd.f32 %v454, %v645
  %647 = vdwg.mxu0
  %648 = vmatpush.bf16.msra.mxu0 %v582
  %649 = vmatpush.bf16.msra.mxu0 %v581
  %650 = vmatpush.bf16.msra.mxu0 %v580
  %651 = vmatpush.bf16.msra.mxu0 %v579
  %652 = vmatpush.bf16.msra.mxu0 %v578
  %653 = vmatpush.bf16.msra.mxu0 %v577
  %654 = vmatpush.bf16.msra.mxu0 %v576
  %655 = vmatpush.bf16.msra.mxu0 %v575
  %656 = vmatmul.bf16.gmra.mxu0 %v390
  %v657 = vpop.f32.mrf.mxu0
  %v658 = vadd.f32 %v639, %v657
  %v659 = vpop.f32.mrf.mxu0
  %v660 = vadd.f32 %v641, %v659
  %661 = vmatmul.bf16.gmra.mxu0 %v394
  %v662 = vpop.f32.mrf.mxu0
  %v663 = vadd.f32 %v644, %v662
  %v664 = vpop.f32.mrf.mxu0
  %v665 = vadd.f32 %v646, %v664
  %666 = vdwg.mxu0
  %667 = vmatpush.bf16.msra.mxu0 %v590
  %668 = vmatpush.bf16.msra.mxu0 %v589
  %669 = vmatpush.bf16.msra.mxu0 %v588
  %670 = vmatpush.bf16.msra.mxu0 %v587
  %671 = vmatpush.bf16.msra.mxu0 %v586
  %672 = vmatpush.bf16.msra.mxu0 %v585
  %673 = vmatpush.bf16.msra.mxu0 %v584
  %674 = vmatpush.bf16.msra.mxu0 %v583
  %675 = vmatmul.bf16.gmra.mxu0 %v391
  %v676 = vpop.f32.mrf.mxu0
  %v677 = vadd.f32 %v658, %v676
  %v678 = vpop.f32.mrf.mxu0
  %v679 = vadd.f32 %v660, %v678
  %680 = vmatmul.bf16.gmra.mxu0 %v395
  %v681 = vpop.f32.mrf.mxu0
  %v682 = vadd.f32 %v663, %v681
  %v683 = vpop.f32.mrf.mxu0
  %v684 = vadd.f32 %v665, %v683
  %685 = vdwg.mxu0
  %686 = vmatpush.bf16.msra.mxu0 0
  %687 = vmatpush.bf16.msra.mxu0 0
  %688 = vmatpush.bf16.msra.mxu0 0
  %689 = vmatpush.bf16.msra.mxu0 0
  %690 = vmatpush.bf16.msra.mxu0 %v594
  %691 = vmatpush.bf16.msra.mxu0 %v593
  %692 = vmatpush.bf16.msra.mxu0 %v592
  %693 = vmatpush.bf16.msra.mxu0 %v591
  %694 = vmatmul.bf16.gmra.mxu0 %v624
  %v695 = vpop.f32.mrf.mxu0
  %v696 = vadd.f32 %v677, %v695
  %v697 = vpop.f32.mrf.mxu0
  %v698 = vadd.f32 %v679, %v697
  %699 = vmatmul.bf16.gmra.mxu0 %v627
  %v700 = vpop.f32.mrf.mxu0
  %v701 = vadd.f32 %v682, %v700
  %v702 = vpop.f32.mrf.mxu0
  %v703 = vadd.f32 %v684, %v702
  %704 = vdwg.mxu0
  %705 = vst [vmem:[%s4] sm:$0xff] %v696
  %706 = vst [vmem:[%s4 + $0x8] sm:$0xff] %v698
  %707 = vst [vmem:[%s4 + $0x10] sm:$0xff] %v701
  %708 = vst [vmem:[%s4 + $0x18] sm:$0xff] %v703
  // Predicated region
  $region18: #{double_conv.1} parent=0 // pred_check
    _
  $region19: #{double_conv.1} parent=0 // pred_check_branch
    %710 = sbr.rel (0) target = $region21
  $region20: #{double_conv.1} parent=0 // pred_region
    _
  $region21: #{double_conv.1} parent=0 // pred_fallthru
    _
  // Predicated region
  $region22: #{double_conv.1} parent=0 // pred_check
    _
  $region23: #{double_conv.1} parent=0 // pred_check_branch
    %712 = sbr.rel (0) target = $region25
  $region24: #{double_conv.1} parent=0 // pred_region
    _
  $region25: #{double_conv.1} parent=0 // pred_fallthru
    _

</llo_original>
